<compile_context>
chip_gen: v7x
topology: tpu7x:2x2x1
jax: 0.10.0
libtpu: 0.0.40
codegen_flags: <defaults>
</compile_context>

<pallas_src>
import functools
import math

import jax
import jax.numpy as jnp
from jax import lax
from jax.experimental import pallas as pl
from jax.experimental.pallas import tpu as pltpu

_NEG_INF = -1e30


def _round_up(x: int, m: int) -> int:
    return (x + m - 1) // m * m


def _attention_head_kernel(q_in_ref, k_in_ref, v_in_ref,
                           wq_ref, bq_ref, wk_ref, bk_ref, wv_ref, bv_ref,
                           o_ref,
                           q_scr, m_scr, l_scr, acc_scr,
                           *, attn_type: str, q_scale: float,
                           seq_k: int, tk: int):
    ki = pl.program_id(2)
    nk = pl.num_programs(2)

    @pl.when(ki == 0)
    def _init():
        # Project Q once per (batch, q-tile); native-dtype operands, f32 accumulate.
        q = jnp.dot(q_in_ref[0], wq_ref[...],
                    preferred_element_type=jnp.float32) + bq_ref[...]
        if attn_type == "cosine":
            # Zero-padded feature columns do not change the L2 norm.  Fold the
            # (optional) softmax scale into the per-row rsqrt vector so only one
            # (tq, dim) multiply is needed.
            norm_inv = lax.rsqrt(jnp.sum(q * q, axis=-1, keepdims=True))
            if q_scale != 1.0:
                norm_inv = norm_inv * q_scale
            q = q * norm_inv
        # Dot-product path: scale already folded into wq/bq in the wrapper.
        q_scr[...] = q.astype(q_scr.dtype)
        m_scr[...] = jnp.full_like(m_scr, -jnp.inf)
        l_scr[...] = jnp.zeros_like(l_scr)
        acc_scr[...] = jnp.zeros_like(acc_scr)

    # K / V projections for this key tile (recomputed per q-tile; nq == 1 for
    # Sq <= tq_max so there is no redundancy at typical head sizes).
    # TODO(synk): for Sq >> tq_max, hoist K/V projection into a separate pass to
    # avoid re-projecting each key tile nq times.
    k = jnp.dot(k_in_ref[0], wk_ref[...],
                preferred_element_type=jnp.float32) + bk_ref[...]
    v = jnp.dot(v_in_ref[0], wv_ref[...],
                preferred_element_type=jnp.float32) + bv_ref[...]
    if attn_type == "cosine":
        k = k * lax.rsqrt(jnp.sum(k * k, axis=-1, keepdims=True))

    # Scores: contract the feature axis directly (no explicit K transpose).
    s = lax.dot_general(q_scr[...], k.astype(q_scr.dtype),
                        dimension_numbers=(((1,), (1,)), ((), ())),
                        preferred_element_type=jnp.float32)        # (tq, tk)

    # Mask padded key rows when Sk is not a tile multiple (additive (1, tk) bias,
    # broadcast over the q rows — cheaper than a full-tile select).
    if seq_k % tk != 0:
        k_idx = ki * tk + lax.broadcasted_iota(jnp.int32, (1, s.shape[-1]), 1)
        s = s + jnp.where(k_idx < seq_k, 0.0, _NEG_INF)

    # Online (flash) softmax update; math stays in f32.
    m_prev = m_scr[...]
    m_new = jnp.maximum(m_prev, jnp.max(s, axis=-1, keepdims=True))
    alpha = jnp.exp(m_prev - m_new)
    p = jnp.exp(s - m_new)
    v_nat = v.astype(v_in_ref.dtype)       # native-dtype MXU operand for P @ V
    l_scr[...] = alpha * l_scr[...] + jnp.sum(p, axis=-1, keepdims=True)
    acc_scr[...] = alpha * acc_scr[...] + jnp.dot(
        p.astype(v_nat.dtype), v_nat, preferred_element_type=jnp.float32)
    m_scr[...] = m_new

    @pl.when(ki == nk - 1)
    def _finalize():
        inv_l = pl.reciprocal(l_scr[...], approx=True)   # EUP slot, ~free
        o_ref[0] = (acc_scr[...] * inv_l).astype(o_ref.dtype)


def attention_head(query, key, value, params, *, attn_type: str, scaled: bool,
                   tq_max: int = 256, tk_max: int = 512):
    """Pallas AttentionHead.forward. query: (B,Sq,dim_in), key/value: (B,Sk,dim_in).
    Returns (B, Sq, dim_k)."""
    B, Sq, dim_in = query.shape
    _, Sk, _ = key.shape
    dim_q = params["wq"].shape[1]
    dim_k = params["wk"].shape[1]
    if dim_q != dim_k:
        raise ValueError("dot/cosine attention requires dim_q == dim_k")

    # Lane-dense projection widths (zero-padding does not change the math).
    dim_qkp = _round_up(dim_q, 128)    # padded Q/K projection width
    dim_vp = _round_up(dim_k, 128)     # padded V projection / output width

    # Flash-style sequence tiles (tq=256 / tk=512 caps keep the double-buffered
    # working set well under the 32 MiB scoped-VMEM budget on v5e/v6e/v7x).
    tq = min(tq_max, _round_up(Sq, 8))
    tk = min(tk_max, _round_up(Sk, 8))
    Sq_p = _round_up(Sq, tq)
    Sk_p = _round_up(Sk, tk)

    if Sq_p != Sq:
        query = jnp.pad(query, ((0, 0), (0, Sq_p - Sq), (0, 0)))
    if Sk_p != Sk:
        key = jnp.pad(key, ((0, 0), (0, Sk_p - Sk), (0, 0)))
        value = jnp.pad(value, ((0, 0), (0, Sk_p - Sk), (0, 0)))

    wq = jnp.pad(params["wq"], ((0, 0), (0, dim_qkp - dim_q)))
    wk = jnp.pad(params["wk"], ((0, 0), (0, dim_qkp - dim_k)))
    wv = jnp.pad(params["wv"], ((0, 0), (0, dim_vp - dim_k)))
    bq = jnp.pad(params["bq"], (0, dim_qkp - dim_q)).reshape(1, dim_qkp)
    bk = jnp.pad(params["bk"], (0, dim_qkp - dim_k)).reshape(1, dim_qkp)
    bv = jnp.pad(params["bv"], (0, dim_vp - dim_k)).reshape(1, dim_vp)

    # Dot-product path: fold the 1/sqrt(dim_q) scale into wq/bq (tiny, one-off
    # wrapper op on a (dim_in, dim_q) weight).  Cosine path: the scale must apply
    # AFTER L2 normalisation, so it is applied in-kernel on the rsqrt vector.
    q_scale = 1.0
    if scaled:
        inv = 1.0 / math.sqrt(float(dim_q))
        if attn_type == "cosine":
            q_scale = inv
        else:
            wq = wq * inv
            bq = bq * inv

    kernel = functools.partial(_attention_head_kernel,
                               attn_type=attn_type, q_scale=q_scale,
                               seq_k=Sk, tk=tk)

    nq = Sq_p // tq
    nk = Sk_p // tk

    # TODO(synk): for workloads with many tiny batches and short Sq, block several
    # batch elements per grid step to fill the MXU M-dimension.
    grid_spec = pltpu.PrefetchScalarGridSpec(
        num_scalar_prefetch=0,
        grid=(B, nq, nk),
        in_specs=[
            pl.BlockSpec((1, tq, dim_in), lambda b, qi, ki: (b, qi, 0)),   # query
            pl.BlockSpec((1, tk, dim_in), lambda b, qi, ki: (b, ki, 0)),   # key
            pl.BlockSpec((1, tk, dim_in), lambda b, qi, ki: (b, ki, 0)),   # value
            pl.BlockSpec((dim_in, dim_qkp), lambda b, qi, ki: (0, 0)),     # wq
            pl.BlockSpec((1, dim_qkp), lambda b, qi, ki: (0, 0)),          # bq
            pl.BlockSpec((dim_in, dim_qkp), lambda b, qi, ki: (0, 0)),     # wk
            pl.BlockSpec((1, dim_qkp), lambda b, qi, ki: (0, 0)),          # bk
            pl.BlockSpec((dim_in, dim_vp), lambda b, qi, ki: (0, 0)),      # wv
            pl.BlockSpec((1, dim_vp), lambda b, qi, ki: (0, 0)),           # bv
        ],
        out_specs=pl.BlockSpec((1, tq, dim_vp), lambda b, qi, ki: (b, qi, 0)),
        scratch_shapes=[
            pltpu.VMEM((tq, dim_qkp), query.dtype),   # projected Q tile (native dtype)
            pltpu.VMEM((tq, 1), jnp.float32),         # running max
            pltpu.VMEM((tq, 1), jnp.float32),         # running denominator
            pltpu.VMEM((tq, dim_vp), jnp.float32),    # output accumulator
        ],
    )

    out = pl.pallas_call(
        kernel,
        out_shape=jax.ShapeDtypeStruct((B, Sq_p, dim_vp), query.dtype),
        grid_spec=grid_spec,
        compiler_params=pltpu.CompilerParams(
            dimension_semantics=("parallel", "parallel", "arbitrary"),
            vmem_limit_bytes=32 * 1024 * 1024),
    )(query, key, value, wq, bq, wk, bk, wv, bv)

    return out[:, :Sq, :dim_k]


def _reference(query, key, value, params, *, attn_type: str, scaled: bool):
    """Pure-JAX reference mirroring the PyTorch module."""
    q = query @ params["wq"] + params["bq"]
    k = key @ params["wk"] + params["bk"]
    v = value @ params["wv"] + params["bv"]
    if attn_type == "cosine":
        q = q / jnp.linalg.norm(q, axis=-1)[:, :, None]
        k = k / jnp.linalg.norm(k, axis=-1)[:, :, None]
    s = jnp.einsum("bqd,bkd->bqk", q, k)
    if scaled:
        s = s / (q.shape[-1] ** 0.5)
    p = jax.nn.softmax(s, axis=-1)
    return jnp.einsum("bqk,bkd->bqd", p, v)


if __name__ == "__main__":
    B, Sq, Sk = 2, 8, 8
    dim_in, dim_q, dim_k = 32, 16, 16

    key0 = jax.random.PRNGKey(0)
    ks = jax.random.split(key0, 9)
    query = jax.random.normal(ks[0], (B, Sq, dim_in), jnp.float32)
    key_t = jax.random.normal(ks[1], (B, Sk, dim_in), jnp.float32)
    value = jax.random.normal(ks[2], (B, Sk, dim_in), jnp.float32)

    lim = 1.0 / math.sqrt(dim_in)
    params = {
        "wq": jax.random.uniform(ks[3], (dim_in, dim_q), jnp.float32, -lim, lim),
        "bq": jax.random.uniform(ks[4], (dim_q,), jnp.float32, -lim, lim),
        "wk": jax.random.uniform(ks[5], (dim_in, dim_k), jnp.float32, -lim, lim),
        "bk": jax.random.uniform(ks[6], (dim_k,), jnp.float32, -lim, lim),
        "wv": jax.random.uniform(ks[7], (dim_in, dim_k), jnp.float32, -lim, lim),
        "bv": jax.random.uniform(ks[8], (dim_k,), jnp.float32, -lim, lim),
    }

    # Dot-product attention, scaled.
    out = jax.block_until_ready(
        attention_head(query, key_t, value, params,
                       attn_type="dot_product", scaled=True))
    ref = _reference(query, key_t, value, params,
                     attn_type="dot_product", scaled=True)
    assert out.shape == (B, Sq, dim_k)
    assert jnp.allclose(out, ref, atol=2e-2, rtol=2e-2), \
        float(jnp.max(jnp.abs(out - ref)))

    # Cosine attention, scaled.
    out_cos = jax.block_until_ready(
        attention_head(query, key_t, value, params,
                       attn_type="cosine", scaled=True))
    ref_cos = _reference(query, key_t, value, params,
                         attn_type="cosine", scaled=True)
    assert jnp.allclose(out_cos, ref_cos, atol=2e-2, rtol=2e-2)

    # Ragged sequence lengths: exercise padding + key-mask path.
    qr = jax.random.normal(ks[0], (B, 12, dim_in), jnp.float32)
    kr = jax.random.normal(ks[1], (B, 20, dim_in), jnp.float32)
    vr = jax.random.normal(ks[2], (B, 20, dim_in), jnp.float32)
    out_r = jax.block_until_ready(
        attention_head(qr, kr, vr, params, attn_type="dot_product", scaled=True))
    ref_r = _reference(qr, kr, vr, params, attn_type="dot_product", scaled=True)
    assert out_r.shape == (B, 12, dim_k)
    assert jnp.allclose(out_r, ref_r, atol=2e-2, rtol=2e-2)

    print("KERNEL_OK")
</pallas_src>

<mosaic_0001>
module attributes {stable_mosaic.version = 11 : i64} {
  func.func @_attention_head_kernel(%arg0: i32, %arg1: i32, %arg2: i32, %arg3: memref<1x8x32xf32, #tpu.memory_space<vmem>>, %arg4: memref<1x8x32xf32, #tpu.memory_space<vmem>>, %arg5: memref<1x8x32xf32, #tpu.memory_space<vmem>>, %arg6: memref<32x128xf32, #tpu.memory_space<vmem>>, %arg7: memref<1x128xf32, #tpu.memory_space<vmem>>, %arg8: memref<32x128xf32, #tpu.memory_space<vmem>>, %arg9: memref<1x128xf32, #tpu.memory_space<vmem>>, %arg10: memref<32x128xf32, #tpu.memory_space<vmem>>, %arg11: memref<1x128xf32, #tpu.memory_space<vmem>>, %arg12: memref<1x8x128xf32, #tpu.memory_space<vmem>>, %arg13: memref<8x128xf32, #tpu.memory_space<vmem>>, %arg14: memref<8x1xf32, #tpu.memory_space<vmem>>, %arg15: memref<8x1xf32, #tpu.memory_space<vmem>>, %arg16: memref<8x128xf32, #tpu.memory_space<vmem>>) attributes {dimension_semantics = [#tpu.dimension_semantics<parallel>, #tpu.dimension_semantics<parallel>, #tpu.dimension_semantics<arbitrary>], iteration_bounds = array<i64: 2, 1, 1>, scalar_prefetch = 0 : i64, scratch_operands = 4 : i64, tpu.core_type = #tpu.core_type<tc>, window_params = [{transform_indices = @transform_0, window_bounds = array<i64: 1, 8, 32>}, {transform_indices = @transform_1, window_bounds = array<i64: 1, 8, 32>}, {transform_indices = @transform_2, window_bounds = array<i64: 1, 8, 32>}, {pipeline_mode = #tpu.pipeline_mode<synchronous>, transform_indices = @transform_3, window_bounds = array<i64: 32, 128>}, {pipeline_mode = #tpu.pipeline_mode<synchronous>, transform_indices = @transform_4, window_bounds = array<i64: 1, 128>}, {pipeline_mode = #tpu.pipeline_mode<synchronous>, transform_indices = @transform_5, window_bounds = array<i64: 32, 128>}, {pipeline_mode = #tpu.pipeline_mode<synchronous>, transform_indices = @transform_6, window_bounds = array<i64: 1, 128>}, {pipeline_mode = #tpu.pipeline_mode<synchronous>, transform_indices = @transform_7, window_bounds = array<i64: 32, 128>}, {pipeline_mode = #tpu.pipeline_mode<synchronous>, transform_indices = @transform_8, window_bounds = array<i64: 1, 128>}, {transform_indices = @transform_9, window_bounds = array<i64: 1, 8, 128>}]} {
    %c0_i32 = arith.constant 0 : i32
    %0 = arith.cmpi eq, %arg2, %c0_i32 : i32
    %1 = arith.extui %0 : i1 to i32
    %c0_i32_0 = arith.constant 0 : i32
    %2 = arith.cmpi ne, %1, %c0_i32_0 : i32
    scf.if %2 {
      %c0_35 = arith.constant 0 : index
      %c0_36 = arith.constant 0 : index
      %c0_37 = arith.constant 0 : index
      %44 = vector.load %arg3[%c0_35, %c0_36, %c0_37] : memref<1x8x32xf32, #tpu.memory_space<vmem>>, vector<1x8x32xf32>
      %45 = vector.shape_cast %44 : vector<1x8x32xf32> to vector<8x32xf32>
      %c0_38 = arith.constant 0 : index
      %c0_39 = arith.constant 0 : index
      %46 = vector.load %arg6[%c0_38, %c0_39] : memref<32x128xf32, #tpu.memory_space<vmem>>, vector<32x128xf32>
      %cst_40 = arith.constant dense<0.000000e+00> : vector<8x128xf32>
      %47 = tpu.matmul %45, %46, %cst_40 {dimension_numbers = #tpu.dot_dimension_numbers<[1], [0], [0], [1], [0, 0, 1, 1], [], []>} : vector<8x32xf32>, vector<32x128xf32>, vector<8x128xf32> -> vector<8x128xf32>
      %c0_41 = arith.constant 0 : index
      %c0_42 = arith.constant 0 : index
      %48 = vector.load %arg7[%c0_41, %c0_42] : memref<1x128xf32, #tpu.memory_space<vmem>>, vector<1x128xf32>
      %49 = vector.broadcast %48 : vector<1x128xf32> to vector<8x128xf32>
      %50 = arith.addf %47, %49 : vector<8x128xf32>
      %c0_43 = arith.constant 0 : index
      %c0_44 = arith.constant 0 : index
      %51 = vector.load %arg13[%c0_43, %c0_44] : memref<8x128xf32, #tpu.memory_space<vmem>>, vector<8x128xf32>
      tpu.vector_store %arg13[%c0_43, %c0_44], %50 {strides = array<i32>} : memref<8x128xf32, #tpu.memory_space<vmem>>, vector<8x128xf32>,
      %cst_45 = arith.constant 0xFF800000 : f32
      %52 = vector.broadcast %cst_45 : f32 to vector<8x1xf32>
      %c0_46 = arith.constant 0 : index
      %c0_47 = arith.constant 0 : index
      %53 = vector.load %arg14[%c0_46, %c0_47] : memref<8x1xf32, #tpu.memory_space<vmem>>, vector<8x1xf32>
      tpu.vector_store %arg14[%c0_46, %c0_47], %52 {strides = array<i32>} : memref<8x1xf32, #tpu.memory_space<vmem>>, vector<8x1xf32>,
      %cst_48 = arith.constant 0.000000e+00 : f32
      %54 = vector.broadcast %cst_48 : f32 to vector<8x1xf32>
      %c0_49 = arith.constant 0 : index
      %c0_50 = arith.constant 0 : index
      %55 = vector.load %arg15[%c0_49, %c0_50] : memref<8x1xf32, #tpu.memory_space<vmem>>, vector<8x1xf32>
      tpu.vector_store %arg15[%c0_49, %c0_50], %54 {strides = array<i32>} : memref<8x1xf32, #tpu.memory_space<vmem>>, vector<8x1xf32>,
      %cst_51 = arith.constant 0.000000e+00 : f32
      %56 = vector.broadcast %cst_51 : f32 to vector<8x128xf32>
      %c0_52 = arith.constant 0 : index
      %c0_53 = arith.constant 0 : index
      %57 = vector.load %arg16[%c0_52, %c0_53] : memref<8x128xf32, #tpu.memory_space<vmem>>, vector<8x128xf32>
      tpu.vector_store %arg16[%c0_52, %c0_53], %56 {strides = array<i32>} : memref<8x128xf32, #tpu.memory_space<vmem>>, vector<8x128xf32>,
    } else {
    }
    %c0 = arith.constant 0 : index
    %c0_1 = arith.constant 0 : index
    %c0_2 = arith.constant 0 : index
    %3 = vector.load %arg4[%c0, %c0_1, %c0_2] : memref<1x8x32xf32, #tpu.memory_space<vmem>>, vector<1x8x32xf32>
    %4 = vector.shape_cast %3 : vector<1x8x32xf32> to vector<8x32xf32>
    %c0_3 = arith.constant 0 : index
    %c0_4 = arith.constant 0 : index
    %5 = vector.load %arg8[%c0_3, %c0_4] : memref<32x128xf32, #tpu.memory_space<vmem>>, vector<32x128xf32>
    %cst = arith.constant dense<0.000000e+00> : vector<8x128xf32>
    %6 = tpu.matmul %4, %5, %cst {dimension_numbers = #tpu.dot_dimension_numbers<[1], [0], [0], [1], [0, 0, 1, 1], [], []>} : vector<8x32xf32>, vector<32x128xf32>, vector<8x128xf32> -> vector<8x128xf32>
    %c0_5 = arith.constant 0 : index
    %c0_6 = arith.constant 0 : index
    %7 = vector.load %arg9[%c0_5, %c0_6] : memref<1x128xf32, #tpu.memory_space<vmem>>, vector<1x128xf32>
    %8 = vector.broadcast %7 : vector<1x128xf32> to vector<8x128xf32>
    %9 = arith.addf %6, %8 : vector<8x128xf32>
    %c0_7 = arith.constant 0 : index
    %c0_8 = arith.constant 0 : index
    %c0_9 = arith.constant 0 : index
    %10 = vector.load %arg5[%c0_7, %c0_8, %c0_9] : memref<1x8x32xf32, #tpu.memory_space<vmem>>, vector<1x8x32xf32>
    %11 = vector.shape_cast %10 : vector<1x8x32xf32> to vector<8x32xf32>
    %c0_10 = arith.constant 0 : index
    %c0_11 = arith.constant 0 : index
    %12 = vector.load %arg10[%c0_10, %c0_11] : memref<32x128xf32, #tpu.memory_space<vmem>>, vector<32x128xf32>
    %cst_12 = arith.constant dense<0.000000e+00> : vector<8x128xf32>
    %13 = tpu.matmul %11, %12, %cst_12 {dimension_numbers = #tpu.dot_dimension_numbers<[1], [0], [0], [1], [0, 0, 1, 1], [], []>} : vector<8x32xf32>, vector<32x128xf32>, vector<8x128xf32> -> vector<8x128xf32>
    %c0_13 = arith.constant 0 : index
    %c0_14 = arith.constant 0 : index
    %14 = vector.load %arg11[%c0_13, %c0_14] : memref<1x128xf32, #tpu.memory_space<vmem>>, vector<1x128xf32>
    %15 = vector.broadcast %14 : vector<1x128xf32> to vector<8x128xf32>
    %16 = arith.addf %13, %15 : vector<8x128xf32>
    %c0_15 = arith.constant 0 : index
    %c0_16 = arith.constant 0 : index
    %17 = vector.load %arg13[%c0_15, %c0_16] : memref<8x128xf32, #tpu.memory_space<vmem>>, vector<8x128xf32>
    %cst_17 = arith.constant dense<0.000000e+00> : vector<8x8xf32>
    %18 = tpu.matmul %17, %9, %cst_17 {dimension_numbers = #tpu.dot_dimension_numbers<[1], [1], [0], [0], [0, 0, 1, 0], [], []>} : vector<8x128xf32>, vector<8x128xf32>, vector<8x8xf32> -> vector<8x8xf32>
    %c0_18 = arith.constant 0 : index
    %c0_19 = arith.constant 0 : index
    %19 = vector.load %arg14[%c0_18, %c0_19] : memref<8x1xf32, #tpu.memory_space<vmem>>, vector<8x1xf32>
    %cst_20 = arith.constant dense<0xFF800000> : vector<8xf32>
    %20 = vector.multi_reduction <maximumf>, %18, %cst_20 [1] : vector<8x8xf32> to vector<8xf32>
    %21 = vector.shape_cast %20 : vector<8xf32> to vector<8x1xf32>
    %22 = arith.maximumf %19, %21 : vector<8x1xf32>
    %23 = arith.subf %19, %22 : vector<8x1xf32>
    %24 = math.exp %23 : vector<8x1xf32>
    %25 = vector.broadcast %22 : vector<8x1xf32> to vector<8x8xf32>
    %26 = arith.subf %18, %25 : vector<8x8xf32>
    %27 = math.exp %26 : vector<8x8xf32>
    %c0_21 = arith.constant 0 : index
    %c0_22 = arith.constant 0 : index
    %28 = vector.load %arg15[%c0_21, %c0_22] : memref<8x1xf32, #tpu.memory_space<vmem>>, vector<8x1xf32>
    %29 = arith.mulf %24, %28 : vector<8x1xf32>
    %cst_23 = arith.constant dense<0.000000e+00> : vector<8xf32>
    %30 = vector.multi_reduction <add>, %27, %cst_23 [1] : vector<8x8xf32> to vector<8xf32>
    %31 = vector.shape_cast %30 : vector<8xf32> to vector<8x1xf32>
    %32 = arith.addf %29, %31 : vector<8x1xf32>
    %c0_24 = arith.constant 0 : index
    %c0_25 = arith.constant 0 : index
    %33 = vector.load %arg15[%c0_24, %c0_25] : memref<8x1xf32, #tpu.memory_space<vmem>>, vector<8x1xf32>
    tpu.vector_store %arg15[%c0_24, %c0_25], %32 {strides = array<i32>} : memref<8x1xf32, #tpu.memory_space<vmem>>, vector<8x1xf32>,
    %c0_26 = arith.constant 0 : index
    %c0_27 = arith.constant 0 : index
    %34 = vector.load %arg16[%c0_26, %c0_27] : memref<8x128xf32, #tpu.memory_space<vmem>>, vector<8x128xf32>
    %35 = vector.broadcast %24 : vector<8x1xf32> to vector<8x128xf32>
    %36 = arith.mulf %35, %34 : vector<8x128xf32>
    %cst_28 = arith.constant dense<0.000000e+00> : vector<8x128xf32>
    %37 = tpu.matmul %27, %16, %cst_28 {dimension_numbers = #tpu.dot_dimension_numbers<[1], [0], [0], [1], [0, 0, 1, 1], [], []>} : vector<8x8xf32>, vector<8x128xf32>, vector<8x128xf32> -> vector<8x128xf32>
    %38 = arith.addf %36, %37 : vector<8x128xf32>
    %c0_29 = arith.constant 0 : index
    %c0_30 = arith.constant 0 : index
    %39 = vector.load %arg16[%c0_29, %c0_30] : memref<8x128xf32, #tpu.memory_space<vmem>>, vector<8x128xf32>
    tpu.vector_store %arg16[%c0_29, %c0_30], %38 {strides = array<i32>} : memref<8x128xf32, #tpu.memory_space<vmem>>, vector<8x128xf32>,
    %c0_31 = arith.constant 0 : index
    %c0_32 = arith.constant 0 : index
    %40 = vector.load %arg14[%c0_31, %c0_32] : memref<8x1xf32, #tpu.memory_space<vmem>>, vector<8x1xf32>
    tpu.vector_store %arg14[%c0_31, %c0_32], %22 {strides = array<i32>} : memref<8x1xf32, #tpu.memory_space<vmem>>, vector<8x1xf32>,
    %c0_i32_33 = arith.constant 0 : i32
    %41 = arith.cmpi eq, %arg2, %c0_i32_33 : i32
    %42 = arith.extui %41 : i1 to i32
    %c0_i32_34 = arith.constant 0 : i32
    %43 = arith.cmpi ne, %42, %c0_i32_34 : i32
    scf.if %43 {
      %c0_35 = arith.constant 0 : index
      %c0_36 = arith.constant 0 : index
      %44 = vector.load %arg15[%c0_35, %c0_36] : memref<8x1xf32, #tpu.memory_space<vmem>>, vector<8x1xf32>
      %45 = tpu.reciprocal %44 {approx = true} : vector<8x1xf32> -> vector<8x1xf32>
      %c0_37 = arith.constant 0 : index
      %c0_38 = arith.constant 0 : index
      %46 = vector.load %arg16[%c0_37, %c0_38] : memref<8x128xf32, #tpu.memory_space<vmem>>, vector<8x128xf32>
      %47 = vector.broadcast %45 : vector<8x1xf32> to vector<8x128xf32>
      %48 = arith.mulf %46, %47 : vector<8x128xf32>
      %c0_39 = arith.constant 0 : index
      %c0_40 = arith.constant 0 : index
      %c0_41 = arith.constant 0 : index
      %49 = vector.load %arg12[%c0_39, %c0_40, %c0_41] : memref<1x8x128xf32, #tpu.memory_space<vmem>>, vector<1x8x128xf32>
      %50 = vector.shape_cast %49 : vector<1x8x128xf32> to vector<8x128xf32>
      %51 = vector.shape_cast %48 : vector<8x128xf32> to vector<1x8x128xf32>
      tpu.vector_store %arg12[%c0_39, %c0_40, %c0_41], %51 {strides = array<i32>} : memref<1x8x128xf32, #tpu.memory_space<vmem>>, vector<1x8x128xf32>,
    } else {
    }
    return
  }
  func.func @transform_0(%arg0: i32, %arg1: i32, %arg2: i32) -> (i32, i32, i32) {
    %c0_i32 = arith.constant 0 : i32
    %c0_i32_0 = arith.constant 0 : i32
    return %arg0, %arg1, %c0_i32 : i32, i32, i32
  }
  func.func @transform_1(%arg0: i32, %arg1: i32, %arg2: i32) -> (i32, i32, i32) {
    %c0_i32 = arith.constant 0 : i32
    %c0_i32_0 = arith.constant 0 : i32
    return %arg0, %arg2, %c0_i32 : i32, i32, i32
  }
  func.func @transform_2(%arg0: i32, %arg1: i32, %arg2: i32) -> (i32, i32, i32) {
    %c0_i32 = arith.constant 0 : i32
    %c0_i32_0 = arith.constant 0 : i32
    return %arg0, %arg2, %c0_i32 : i32, i32, i32
  }
  func.func @transform_3(%arg0: i32, %arg1: i32, %arg2: i32) -> (i32, i32) {
    %c0_i32 = arith.constant 0 : i32
    %c0_i32_0 = arith.constant 0 : i32
    %c0_i32_1 = arith.constant 0 : i32
    return %c0_i32, %c0_i32_0 : i32, i32
  }
  func.func @transform_4(%arg0: i32, %arg1: i32, %arg2: i32) -> (i32, i32) {
    %c0_i32 = arith.constant 0 : i32
    %c0_i32_0 = arith.constant 0 : i32
    %c0_i32_1 = arith.constant 0 : i32
    return %c0_i32, %c0_i32_0 : i32, i32
  }
  func.func @transform_5(%arg0: i32, %arg1: i32, %arg2: i32) -> (i32, i32) {
    %c0_i32 = arith.constant 0 : i32
    %c0_i32_0 = arith.constant 0 : i32
    %c0_i32_1 = arith.constant 0 : i32
    return %c0_i32, %c0_i32_0 : i32, i32
  }
  func.func @transform_6(%arg0: i32, %arg1: i32, %arg2: i32) -> (i32, i32) {
    %c0_i32 = arith.constant 0 : i32
    %c0_i32_0 = arith.constant 0 : i32
    %c0_i32_1 = arith.constant 0 : i32
    return %c0_i32, %c0_i32_0 : i32, i32
  }
  func.func @transform_7(%arg0: i32, %arg1: i32, %arg2: i32) -> (i32, i32) {
    %c0_i32 = arith.constant 0 : i32
    %c0_i32_0 = arith.constant 0 : i32
    %c0_i32_1 = arith.constant 0 : i32
    return %c0_i32, %c0_i32_0 : i32, i32
  }
  func.func @transform_8(%arg0: i32, %arg1: i32, %arg2: i32) -> (i32, i32) {
    %c0_i32 = arith.constant 0 : i32
    %c0_i32_0 = arith.constant 0 : i32
    %c0_i32_1 = arith.constant 0 : i32
    return %c0_i32, %c0_i32_0 : i32, i32
  }
  func.func @transform_9(%arg0: i32, %arg1: i32, %arg2: i32) -> (i32, i32, i32) {
    %c0_i32 = arith.constant 0 : i32
    %c0_i32_0 = arith.constant 0 : i32
    return %arg0, %arg1, %c0_i32 : i32, i32, i32
  }
}

</mosaic_0001>

<llo_original>
// kernel: tpu_custom_call.1
$region0: #{tpu_custom_call.1}
  #allocation0 [shape = 'u32[]', space=smem, size = 0x4, offset = 0x4, fixed_abs, tag = 'smem constant byte address 0x4 - core index']
  #allocation1 [shape = 'u32[144,128]{1,0:T(1,128)}', space=vmem, size = 0x12000, scoped, tag = 'internal scratch']
  #allocation2 [shape = 'f32[8,128]{1,0:T(8,128)}', space=vmem, size = 0x1000, scoped, tag = 'scratch operand']
  #allocation3 [shape = 'f32[8,1]{1,0:T(8,128)}', space=vmem, size = 0x1000, scoped, tag = 'scratch operand']
  #allocation4 [shape = 'f32[8,1]{1,0:T(8,128)}', space=vmem, size = 0x1000, scoped, tag = 'scratch operand']
  #allocation5 [shape = 'f32[8,128]{1,0:T(8,128)}', space=vmem, size = 0x1000, scoped, tag = 'scratch operand']
  %s0 = inlined_call_operand.hbm [shape: f32[2,8,32], index: 0, kind: input, shape index: {}]
  %s1 = inlined_call_operand.hbm [shape: f32[2,8,32], index: 1, kind: input, shape index: {}]
  %s2 = inlined_call_operand.hbm [shape: f32[2,8,32], index: 2, kind: input, shape index: {}]
  %s3 = inlined_call_operand.hbm [shape: f32[32,128], index: 3, kind: input, shape index: {}]
  %s4 = inlined_call_operand.vmem [shape: f32[1,128], index: 4, kind: input, shape index: {}]
  %s5 = inlined_call_operand.hbm [shape: f32[32,128], index: 5, kind: input, shape index: {}]
  %s6 = inlined_call_operand.vmem [shape: f32[1,128], index: 6, kind: input, shape index: {}]
  %s7 = inlined_call_operand.hbm [shape: f32[32,128], index: 7, kind: input, shape index: {}]
  %s8 = inlined_call_operand.vmem [shape: f32[1,128], index: 8, kind: input, shape index: {}]
  %s9 = inlined_call_operand.hbm [shape: f32[2,8,128], index: 9, kind: output, shape index: {}]
  %s10 = sld [smem:[#allocation0]]
  $region101: #{tpu_custom_call.1} parent=0
    _
  %s12 = ssub.s32 1, %s10
  %s13 = scalar_select 0, %s12, %s10
  $region1: #{tpu_custom_call.1} parent=0
    #allocation6 [shape = 'u8[8192]{0}', space=vmem, size = 0x2000, scoped, tag = 'input window, operand 0']
    #allocation7 [shape = 's32[2]{0}', space=sflag, size = 0x8, scoped, tag = 'scoped memory for tpu_custom_call.1']
    #allocation8 [shape = 's32[2]{0}', space=sflag, size = 0x8, scoped, tag = 'scoped memory for tpu_custom_call.1']
    #allocation9 [shape = 'u8[8192]{0}', space=vmem, size = 0x2000, scoped, tag = 'input window, operand 1']
    #allocation10 [shape = 's32[2]{0}', space=sflag, size = 0x8, scoped, tag = 'scoped memory for tpu_custom_call.1']
    #allocation11 [shape = 'u8[8192]{0}', space=vmem, size = 0x2000, scoped, tag = 'input window, operand 2']
    #allocation12 [shape = 'u8[16384]{0}', space=vmem, size = 0x4000, scoped, tag = 'input window, operand 3, single buffered']
    #allocation13 [shape = 's32[1]{0}', space=sflag, size = 0x4, scoped, tag = 'scoped memory for tpu_custom_call.1']
    #allocation14 [shape = 'u8[16384]{0}', space=vmem, size = 0x4000, scoped, tag = 'input window, operand 5, single buffered']
    #allocation15 [shape = 'u8[16384]{0}', space=vmem, size = 0x4000, scoped, tag = 'input window, operand 7, single buffered']
    #allocation16 [shape = 's32[1]{0}', space=sflag, size = 0x4, scoped, tag = 'scoped memory for tpu_custom_call.1']
    #allocation17 [shape = 'u8[8192]{0}', space=vmem, size = 0x2000, scoped, tag = 'output window, operand 0']
    %14 = vsyncpa [#allocation7], 0
    %s15 = scalar_lea.sflag [#allocation7], 1
    %16 = vsyncpa %s15, 0
    %17 = vsyncpa [#allocation10], 0
    %s18 = scalar_lea.sflag [#allocation10], 1
    %19 = vsyncpa %s18, 0
    %20 = vsyncpa [#allocation13], 0
    %21 = vsyncpa [#allocation16], 0
    %22 = vsyncpa [#allocation8], 0
    %s23 = scalar_lea.sflag [#allocation8], 1
    %24 = vsyncpa %s23, 0
    loop: start=0, step=1, limit=4
    $region2: #{tpu_custom_call.1} parent=1 // loop_pre_header
      _
    $region3: #{tpu_custom_call.1} parent=1 // loop_header
      %s26 = sphi 0, %s30
      %p27 = scmp.ge.s32.totalorder %s26, 4
      %s33 = sphi 0, %s52
      %s34 = sphi 0, %s48
      %s35 = sphi 0, %s44
      %s36 = sphi 0, %s33
      %s37 = sphi 0, %s34
      %s38 = sphi 0, %s35
      %s39 = sphi 0, %s36
      %s40 = sphi 0, %s37
      %s41 = sphi 0, %s38
      %s57 = sphi 0, %s59
      %s60 = sphi 0, %s57
      %s61 = sphi 0, %s60
      %s77 = sphi 0, %s61
      %s85 = sphi 0, %s87
      %s88 = sphi 0, %s85
      %s89 = sphi 0, %s88
      %s105 = sphi 0, %s89
      %s113 = sphi 0, %s115
      %s116 = sphi 0, %s113
      %s117 = sphi 0, %s116
      %s133 = sphi 0, %s117
      %s137 = sphi 0, %s137
      %s139 = sphi 0, %s137
      %s140 = sphi 0, %s139
      %s154 = sphi 0, %s140
      %s158 = sphi 0, %s158
      %s160 = sphi 0, %s158
      %s161 = sphi 0, %s160
      %s175 = sphi 0, %s161
      %s179 = sphi 0, %s179
      %s181 = sphi 0, %s179
      %s182 = sphi 0, %s181
      %s196 = sphi 0, %s182
      %s200 = sphi 0, %s200
      %s202 = sphi 0, %s200
      %s203 = sphi 0, %s202
      %s217 = sphi 0, %s203
      %s221 = sphi 0, %s221
      %s223 = sphi 0, %s221
      %s224 = sphi 0, %s223
      %s238 = sphi 0, %s224
      %s242 = sphi 0, %s242
      %s244 = sphi 0, %s242
      %s245 = sphi 0, %s244
      %s259 = sphi 0, %s245
      %s267 = sphi 0, %s269
      %s270 = sphi 0, %s267
      %s271 = sphi 0, %s270
      %s287 = sphi 0, %s271
    $region4: #{tpu_custom_call.1} parent=1 // loop_header_branch
      %29 = sbr.rel (%p27) target = $region8
    $region5: #{tpu_custom_call.1} parent=1 // loop_body
      %s31 = ssub.s32 %s26, 1
      %s32 = ssub.s32 %s26, 2
      %s42 = sadd.s32 1, %s35
      %p43 = scmp.ge.s32.totalorder %s42, 1
      %s44 = scalar_select %p43, 0, %s42
      %s45 = sadd.s32 1, %s34
      %s46 = scalar_select %p43, %s45, %s34
      %p47 = scmp.ge.s32.totalorder %s46, 1
      %s48 = scalar_select %p47, 0, %s46
      %s49 = sadd.s32 1, %s33
      %s50 = scalar_select %p47, %s49, %s33
      %p51 = scmp.ge.s32.totalorder %s50, 2
      %s52 = scalar_select %p51, 0, %s50
      %s53 = ssub.s32 %s33, %s52
      %s54 = ssub.s32 %s34, %s48
      %s55 = sor.u32 %s53, %s54
      %p56 = scmp.eq.s32.totalorder %s55, 0
      %s58 = sadd.s32 %s57, 1
      %s59 = scalar_select %p56, %s57, %s58
      %p62 = pneg %p56
      %p63 = scmp.eq.s32.totalorder %s26, 1
      %p64 = por %p62, %p63
      %p65 = scmp.ne.s32.totalorder %s57, %s60
      %p66 = scmp.eq.s32.totalorder %s26, 0
      %p67 = por %p65, %p66
      %p68 = scmp.ne.s32.totalorder %s57, %s60
      %p69 = scmp.eq.s32.totalorder %s31, 1
      %p70 = por %p68, %p69
      %p71 = scmp.ne.s32.totalorder %s60, %s61
      %p72 = scmp.eq.s32.totalorder %s31, 0
      %p73 = por %p71, %p72
      %p74 = scmp.ne.s32.totalorder %s60, %s61
      %p75 = scmp.eq.s32.totalorder %s32, 1
      %p76 = por %p74, %p75
      %p78 = scmp.ne.s32.totalorder %s61, %s77
      %p79 = scmp.eq.s32.totalorder %s32, 0
      %p80 = por %p78, %p79
      %s81 = ssub.s32 %s33, %s52
      %s82 = ssub.s32 %s35, %s44
      %s83 = sor.u32 %s81, %s82
      %p84 = scmp.eq.s32.totalorder %s83, 0
      %s86 = sadd.s32 %s85, 1
      %s87 = scalar_select %p84, %s85, %s86
      %p90 = pneg %p84
      %p91 = scmp.eq.s32.totalorder %s26, 1
      %p92 = por %p90, %p91
      %p93 = scmp.ne.s32.totalorder %s85, %s88
      %p94 = scmp.eq.s32.totalorder %s26, 0
      %p95 = por %p93, %p94
      %p96 = scmp.ne.s32.totalorder %s85, %s88
      %p97 = scmp.eq.s32.totalorder %s31, 1
      %p98 = por %p96, %p97
      %p99 = scmp.ne.s32.totalorder %s88, %s89
      %p100 = scmp.eq.s32.totalorder %s31, 0
      %p101 = por %p99, %p100
      %p102 = scmp.ne.s32.totalorder %s88, %s89
      %p103 = scmp.eq.s32.totalorder %s32, 1
      %p104 = por %p102, %p103
      %p106 = scmp.ne.s32.totalorder %s89, %s105
      %p107 = scmp.eq.s32.totalorder %s32, 0
      %p108 = por %p106, %p107
      %s109 = ssub.s32 %s33, %s52
      %s110 = ssub.s32 %s35, %s44
      %s111 = sor.u32 %s109, %s110
      %p112 = scmp.eq.s32.totalorder %s111, 0
      %s114 = sadd.s32 %s113, 1
      %s115 = scalar_select %p112, %s113, %s114
      %p118 = pneg %p112
      %p119 = scmp.eq.s32.totalorder %s26, 1
      %p120 = por %p118, %p119
      %p121 = scmp.ne.s32.totalorder %s113, %s116
      %p122 = scmp.eq.s32.totalorder %s26, 0
      %p123 = por %p121, %p122
      %p124 = scmp.ne.s32.totalorder %s113, %s116
      %p125 = scmp.eq.s32.totalorder %s31, 1
      %p126 = por %p124, %p125
      %p127 = scmp.ne.s32.totalorder %s116, %s117
      %p128 = scmp.eq.s32.totalorder %s31, 0
      %p129 = por %p127, %p128
      %p130 = scmp.ne.s32.totalorder %s116, %s117
      %p131 = scmp.eq.s32.totalorder %s32, 1
      %p132 = por %p130, %p131
      %p134 = scmp.ne.s32.totalorder %s117, %s133
      %p135 = scmp.eq.s32.totalorder %s32, 0
      %p136 = por %p134, %p135
      %s138 = sadd.s32 %s137, 1
      %p141 = scmp.eq.s32.totalorder %s26, 1
      %p142 = scmp.ne.s32.totalorder %s137, %s139
      %p143 = scmp.eq.s32.totalorder %s26, 0
      %p144 = por %p142, %p143
      %p145 = scmp.ne.s32.totalorder %s137, %s139
      %p146 = scmp.eq.s32.totalorder %s31, 1
      %p147 = por %p145, %p146
      %p148 = scmp.ne.s32.totalorder %s139, %s140
      %p149 = scmp.eq.s32.totalorder %s31, 0
      %p150 = por %p148, %p149
      %p151 = scmp.ne.s32.totalorder %s139, %s140
      %p152 = scmp.eq.s32.totalorder %s32, 1
      %p153 = por %p151, %p152
      %p155 = scmp.ne.s32.totalorder %s140, %s154
      %p156 = scmp.eq.s32.totalorder %s32, 0
      %p157 = por %p155, %p156
      %s159 = sadd.s32 %s158, 1
      %p162 = scmp.eq.s32.totalorder %s26, 1
      %p163 = scmp.ne.s32.totalorder %s158, %s160
      %p164 = scmp.eq.s32.totalorder %s26, 0
      %p165 = por %p163, %p164
      %p166 = scmp.ne.s32.totalorder %s158, %s160
      %p167 = scmp.eq.s32.totalorder %s31, 1
      %p168 = por %p166, %p167
      %p169 = scmp.ne.s32.totalorder %s160, %s161
      %p170 = scmp.eq.s32.totalorder %s31, 0
      %p171 = por %p169, %p170
      %p172 = scmp.ne.s32.totalorder %s160, %s161
      %p173 = scmp.eq.s32.totalorder %s32, 1
      %p174 = por %p172, %p173
      %p176 = scmp.ne.s32.totalorder %s161, %s175
      %p177 = scmp.eq.s32.totalorder %s32, 0
      %p178 = por %p176, %p177
      %s180 = sadd.s32 %s179, 1
      %p183 = scmp.eq.s32.totalorder %s26, 1
      %p184 = scmp.ne.s32.totalorder %s179, %s181
      %p185 = scmp.eq.s32.totalorder %s26, 0
      %p186 = por %p184, %p185
      %p187 = scmp.ne.s32.totalorder %s179, %s181
      %p188 = scmp.eq.s32.totalorder %s31, 1
      %p189 = por %p187, %p188
      %p190 = scmp.ne.s32.totalorder %s181, %s182
      %p191 = scmp.eq.s32.totalorder %s31, 0
      %p192 = por %p190, %p191
      %p193 = scmp.ne.s32.totalorder %s181, %s182
      %p194 = scmp.eq.s32.totalorder %s32, 1
      %p195 = por %p193, %p194
      %p197 = scmp.ne.s32.totalorder %s182, %s196
      %p198 = scmp.eq.s32.totalorder %s32, 0
      %p199 = por %p197, %p198
      %s201 = sadd.s32 %s200, 1
      %p204 = scmp.eq.s32.totalorder %s26, 1
      %p205 = scmp.ne.s32.totalorder %s200, %s202
      %p206 = scmp.eq.s32.totalorder %s26, 0
      %p207 = por %p205, %p206
      %p208 = scmp.ne.s32.totalorder %s200, %s202
      %p209 = scmp.eq.s32.totalorder %s31, 1
      %p210 = por %p208, %p209
      %p211 = scmp.ne.s32.totalorder %s202, %s203
      %p212 = scmp.eq.s32.totalorder %s31, 0
      %p213 = por %p211, %p212
      %p214 = scmp.ne.s32.totalorder %s202, %s203
      %p215 = scmp.eq.s32.totalorder %s32, 1
      %p216 = por %p214, %p215
      %p218 = scmp.ne.s32.totalorder %s203, %s217
      %p219 = scmp.eq.s32.totalorder %s32, 0
      %p220 = por %p218, %p219
      %s222 = sadd.s32 %s221, 1
      %p225 = scmp.eq.s32.totalorder %s26, 1
      %p226 = scmp.ne.s32.totalorder %s221, %s223
      %p227 = scmp.eq.s32.totalorder %s26, 0
      %p228 = por %p226, %p227
      %p229 = scmp.ne.s32.totalorder %s221, %s223
      %p230 = scmp.eq.s32.totalorder %s31, 1
      %p231 = por %p229, %p230
      %p232 = scmp.ne.s32.totalorder %s223, %s224
      %p233 = scmp.eq.s32.totalorder %s31, 0
      %p234 = por %p232, %p233
      %p235 = scmp.ne.s32.totalorder %s223, %s224
      %p236 = scmp.eq.s32.totalorder %s32, 1
      %p237 = por %p235, %p236
      %p239 = scmp.ne.s32.totalorder %s224, %s238
      %p240 = scmp.eq.s32.totalorder %s32, 0
      %p241 = por %p239, %p240
      %s243 = sadd.s32 %s242, 1
      %p246 = scmp.eq.s32.totalorder %s26, 1
      %p247 = scmp.ne.s32.totalorder %s242, %s244
      %p248 = scmp.eq.s32.totalorder %s26, 0
      %p249 = por %p247, %p248
      %p250 = scmp.ne.s32.totalorder %s242, %s244
      %p251 = scmp.eq.s32.totalorder %s31, 1
      %p252 = por %p250, %p251
      %p253 = scmp.ne.s32.totalorder %s244, %s245
      %p254 = scmp.eq.s32.totalorder %s31, 0
      %p255 = por %p253, %p254
      %p256 = scmp.ne.s32.totalorder %s244, %s245
      %p257 = scmp.eq.s32.totalorder %s32, 1
      %p258 = por %p256, %p257
      %p260 = scmp.ne.s32.totalorder %s245, %s259
      %p261 = scmp.eq.s32.totalorder %s32, 0
      %p262 = por %p260, %p261
      %s263 = ssub.s32 %s33, %s52
      %s264 = ssub.s32 %s34, %s48
      %s265 = sor.u32 %s263, %s264
      %p266 = scmp.eq.s32.totalorder %s265, 0
      %s268 = sadd.s32 %s267, 1
      %s269 = scalar_select %p266, %s267, %s268
      %p272 = pneg %p266
      %p273 = scmp.eq.s32.totalorder %s26, 1
      %p274 = por %p272, %p273
      %p275 = scmp.ne.s32.totalorder %s267, %s270
      %p276 = scmp.eq.s32.totalorder %s26, 0
      %p277 = por %p275, %p276
      %p278 = scmp.ne.s32.totalorder %s267, %s270
      %p279 = scmp.eq.s32.totalorder %s31, 1
      %p280 = por %p278, %p279
      %p281 = scmp.ne.s32.totalorder %s270, %s271
      %p282 = scmp.eq.s32.totalorder %s31, 0
      %p283 = por %p281, %p282
      %p284 = scmp.ne.s32.totalorder %s270, %s271
      %p285 = scmp.eq.s32.totalorder %s32, 1
      %p286 = por %p284, %p285
      %p288 = scmp.ne.s32.totalorder %s271, %s287
      %p289 = scmp.eq.s32.totalorder %s32, 0
      %p290 = por %p288, %p289
      %p291 = scmp.le.s32.totalorder 1, %s26
      %p292 = scmp.lt.s32.totalorder %s26, 3
      %p293 = pnand %p291, %p292
      %p294 = pneg %p293
      // Predicated region
      $region9: #{tpu_custom_call.1} parent=5 // pred_check
        _
      $region10: #{tpu_custom_call.1} parent=5 // pred_check_branch
        %296 = sbr.rel (%p293) target = $region12
      $region11: #{tpu_custom_call.1} parent=5 // pred_region
        %s297 = ssub.s32 %s26, 1
        // Predicated region
        $region13: #{tpu_custom_call.1} parent=11 // pred_check
          %p298 = pneg %p150
        $region14: #{tpu_custom_call.1} parent=11 // pred_check_branch
          %300 = sbr.rel (%p298) target = $region16
        $region15: #{tpu_custom_call.1} parent=11 // pred_region
          %s302 = ssub.s32 512, 512
          %303 = vsyncadd [#allocation13], %s302
          %s304 = sshll.u32 [#allocation12], 4
          %s305 = int_to_ptr.vmem [resolvable:$true] %s304
          %310 = dma.hbm_to_vmem [thread:$0]  %s3, 512, %s305, [#allocation13], 128, 128, 8
        $region16: #{tpu_custom_call.1} parent=11 // pred_fallthru
          _
        // Predicated region
        $region17: #{tpu_custom_call.1} parent=11 // pred_check
          %p311 = pneg %p171
        $region18: #{tpu_custom_call.1} parent=11 // pred_check_branch
          %313 = sbr.rel (%p311) target = $region20
        $region19: #{tpu_custom_call.1} parent=11 // pred_region
          _
        $region20: #{tpu_custom_call.1} parent=11 // pred_fallthru
          _
        // Predicated region
        $region21: #{tpu_custom_call.1} parent=11 // pred_check
          %p314 = pneg %p192
        $region22: #{tpu_custom_call.1} parent=11 // pred_check_branch
          %316 = sbr.rel (%p314) target = $region24
        $region23: #{tpu_custom_call.1} parent=11 // pred_region
          %s318 = ssub.s32 512, 512
          %319 = vsyncadd [#allocation13], %s318
          %s320 = sshll.u32 [#allocation14], 4
          %s321 = int_to_ptr.vmem [resolvable:$true] %s320
          %326 = dma.hbm_to_vmem [thread:$0]  %s5, 512, %s321, [#allocation13], 128, 128, 8
        $region24: #{tpu_custom_call.1} parent=11 // pred_fallthru
          _
        // Predicated region
        $region25: #{tpu_custom_call.1} parent=11 // pred_check
          %p327 = pneg %p213
        $region26: #{tpu_custom_call.1} parent=11 // pred_check_branch
          %329 = sbr.rel (%p327) target = $region28
        $region27: #{tpu_custom_call.1} parent=11 // pred_region
          _
        $region28: #{tpu_custom_call.1} parent=11 // pred_fallthru
          _
        // Predicated region
        $region29: #{tpu_custom_call.1} parent=11 // pred_check
          %p330 = pneg %p234
        $region30: #{tpu_custom_call.1} parent=11 // pred_check_branch
          %332 = sbr.rel (%p330) target = $region32
        $region31: #{tpu_custom_call.1} parent=11 // pred_region
          %s334 = ssub.s32 512, 512
          %335 = vsyncadd [#allocation16], %s334
          %s336 = sshll.u32 [#allocation15], 4
          %s337 = int_to_ptr.vmem [resolvable:$true] %s336
          %342 = dma.hbm_to_vmem [thread:$0]  %s7, 512, %s337, [#allocation16], 128, 128, 8
        $region32: #{tpu_custom_call.1} parent=11 // pred_fallthru
          _
        // Predicated region
        $region33: #{tpu_custom_call.1} parent=11 // pred_check
          %p343 = pneg %p255
        $region34: #{tpu_custom_call.1} parent=11 // pred_check_branch
          %345 = sbr.rel (%p343) target = $region36
        $region35: #{tpu_custom_call.1} parent=11 // pred_region
          _
        $region36: #{tpu_custom_call.1} parent=11 // pred_fallthru
          _
      $region12: #{tpu_custom_call.1} parent=5 // pred_fallthru
        _
      %p346 = scmp.lt.s32.totalorder %s26, 2
      // Predicated region
      $region37: #{tpu_custom_call.1} parent=5 // pred_check
        %p347 = pneg %p346
      $region38: #{tpu_custom_call.1} parent=5 // pred_check_branch
        %349 = sbr.rel (%p347) target = $region40
      $region39: #{tpu_custom_call.1} parent=5 // pred_region
        // Predicated region
        $region41: #{tpu_custom_call.1} parent=39 // pred_check
          %p350 = pneg %p67
        $region42: #{tpu_custom_call.1} parent=39 // pred_check_branch
          %352 = sbr.rel (%p350) target = $region44
        $region43: #{tpu_custom_call.1} parent=39 // pred_region
          %s353 = sand.u32 %s57, 1
          %s354 = scalar_lea.sflag [#allocation7], %s353
          %s355 = sand.u32 %s57, 1
          %s356 = smul.addr %s355, 8
          %s357 = scalar_lea.vmem [#allocation6], %s356
          %s359 = ssub.s32 128, 128
          %360 = vsyncadd %s354, %s359
          %s361 = sadd.s32 %s34, %s33
          %s362 = smul.addr %s361, 128
          %s363 = scalar_lea.hbm %s0, %s362
          %s365 = sshll.u32 %s357, 4
          %s366 = int_to_ptr.vmem [resolvable:$true] %s365
          %368 = dma.hbm_to_vmem [thread:$0]  %s363, 128, %s366, %s354
        $region44: #{tpu_custom_call.1} parent=39 // pred_fallthru
          _
        // Predicated region
        $region45: #{tpu_custom_call.1} parent=39 // pred_check
          %p369 = pneg %p95
        $region46: #{tpu_custom_call.1} parent=39 // pred_check_branch
          %371 = sbr.rel (%p369) target = $region48
        $region47: #{tpu_custom_call.1} parent=39 // pred_region
          %s372 = sand.u32 %s26, 1
          %s373 = scalar_lea.sflag [#allocation10], %s372
          %s374 = sand.u32 %s85, 1
          %s375 = smul.addr %s374, 8
          %s376 = scalar_lea.vmem [#allocation9], %s375
          %s378 = ssub.s32 128, 128
          %379 = vsyncadd %s373, %s378
          %s380 = sadd.s32 %s35, %s33
          %s381 = smul.addr %s380, 128
          %s382 = scalar_lea.hbm %s1, %s381
          %s384 = sshll.u32 %s376, 4
          %s385 = int_to_ptr.vmem [resolvable:$true] %s384
          %387 = dma.hbm_to_vmem [thread:$0]  %s382, 128, %s385, %s373
        $region48: #{tpu_custom_call.1} parent=39 // pred_fallthru
          _
        // Predicated region
        $region49: #{tpu_custom_call.1} parent=39 // pred_check
          %p388 = pneg %p123
        $region50: #{tpu_custom_call.1} parent=39 // pred_check_branch
          %390 = sbr.rel (%p388) target = $region52
        $region51: #{tpu_custom_call.1} parent=39 // pred_region
          %s391 = sand.u32 %s26, 1
          %s392 = scalar_lea.sflag [#allocation10], %s391
          %s393 = sand.u32 %s113, 1
          %s394 = smul.addr %s393, 8
          %s395 = scalar_lea.vmem [#allocation11], %s394
          %s397 = ssub.s32 128, 128
          %398 = vsyncadd %s392, %s397
          %s399 = sadd.s32 %s35, %s33
          %s400 = smul.addr %s399, 128
          %s401 = scalar_lea.hbm %s2, %s400
          %s403 = sshll.u32 %s395, 4
          %s404 = int_to_ptr.vmem [resolvable:$true] %s403
          %406 = dma.hbm_to_vmem [thread:$0]  %s401, 128, %s404, %s392
        $region52: #{tpu_custom_call.1} parent=39 // pred_fallthru
          _
      $region40: #{tpu_custom_call.1} parent=5 // pred_fallthru
        _
      %p407 = scmp.le.s32.totalorder 1, %s26
      %p408 = scmp.lt.s32.totalorder %s26, 3
      %p409 = pnand %p407, %p408
      %p410 = pneg %p409
      // Predicated region
      $region53: #{tpu_custom_call.1} parent=5 // pred_check
        _
      $region54: #{tpu_custom_call.1} parent=5 // pred_check_branch
        %412 = sbr.rel (%p409) target = $region56
      $region55: #{tpu_custom_call.1} parent=5 // pred_region
        %s413 = ssub.s32 %s26, 1
        %s414 = sand.u32 %s60, 1
        %s415 = scalar_lea.sflag [#allocation7], %s414
        %s416 = sand.u32 %s60, 1
        %s417 = smul.addr %s416, 8
        %s418 = scalar_lea.vmem [#allocation6], %s417
        // Predicated region
        $region57: #{tpu_custom_call.1} parent=55 // pred_check
          %p419 = pneg %p73
        $region58: #{tpu_custom_call.1} parent=55 // pred_check_branch
          %421 = sbr.rel (%p419) target = $region60
        $region59: #{tpu_custom_call.1} parent=55 // pred_region
          %422 = dma.done %s415, 128
        $region60: #{tpu_custom_call.1} parent=55 // pred_fallthru
          _
        %s423 = sand.u32 %s31, 1
        %s424 = scalar_lea.sflag [#allocation10], %s423
        %s425 = sand.u32 %s88, 1
        %s426 = smul.addr %s425, 8
        %s427 = scalar_lea.vmem [#allocation9], %s426
        // Predicated region
        $region61: #{tpu_custom_call.1} parent=55 // pred_check
          %p428 = pneg %p101
        $region62: #{tpu_custom_call.1} parent=55 // pred_check_branch
          %430 = sbr.rel (%p428) target = $region64
        $region63: #{tpu_custom_call.1} parent=55 // pred_region
          %431 = dma.done %s424, 128
        $region64: #{tpu_custom_call.1} parent=55 // pred_fallthru
          _
        %s432 = sand.u32 %s31, 1
        %s433 = scalar_lea.sflag [#allocation10], %s432
        %s434 = sand.u32 %s116, 1
        %s435 = smul.addr %s434, 8
        %s436 = scalar_lea.vmem [#allocation11], %s435
        // Predicated region
        $region65: #{tpu_custom_call.1} parent=55 // pred_check
          %p437 = pneg %p129
        $region66: #{tpu_custom_call.1} parent=55 // pred_check_branch
          %439 = sbr.rel (%p437) target = $region68
        $region67: #{tpu_custom_call.1} parent=55 // pred_region
          %440 = dma.done %s433, 128
        $region68: #{tpu_custom_call.1} parent=55 // pred_fallthru
          _
        // Predicated region
        $region69: #{tpu_custom_call.1} parent=55 // pred_check
          %p441 = pneg %p150
        $region70: #{tpu_custom_call.1} parent=55 // pred_check_branch
          %443 = sbr.rel (%p441) target = $region72
        $region71: #{tpu_custom_call.1} parent=55 // pred_region
          %444 = dma.done [#allocation13], 512
        $region72: #{tpu_custom_call.1} parent=55 // pred_fallthru
          _
        // Predicated region
        $region73: #{tpu_custom_call.1} parent=55 // pred_check
          %p445 = pneg %p192
        $region74: #{tpu_custom_call.1} parent=55 // pred_check_branch
          %447 = sbr.rel (%p445) target = $region76
        $region75: #{tpu_custom_call.1} parent=55 // pred_region
          %448 = dma.done [#allocation13], 512
        $region76: #{tpu_custom_call.1} parent=55 // pred_fallthru
          _
        // Predicated region
        $region77: #{tpu_custom_call.1} parent=55 // pred_check
          %p449 = pneg %p234
        $region78: #{tpu_custom_call.1} parent=55 // pred_check_branch
          %451 = sbr.rel (%p449) target = $region80
        $region79: #{tpu_custom_call.1} parent=55 // pred_region
          %452 = dma.done [#allocation16], 512
        $region80: #{tpu_custom_call.1} parent=55 // pred_fallthru
          _
        %s453 = sand.u32 %s60, 1
        %s454 = scalar_lea.sflag [#allocation7], %s453
        %s455 = sand.u32 %s60, 1
        %s456 = smul.addr %s455, 8
        %s457 = scalar_lea.vmem [#allocation6], %s456
        %p458 = pneg %p73
        %p459 = pneg %p70
        %s460 = sand.u32 %s31, 1
        %s461 = scalar_lea.sflag [#allocation10], %s460
        %s462 = sand.u32 %s88, 1
        %s463 = smul.addr %s462, 8
        %s464 = scalar_lea.vmem [#allocation9], %s463
        %p465 = pneg %p101
        %p466 = pneg %p98
        %s467 = sand.u32 %s31, 1
        %s468 = scalar_lea.sflag [#allocation10], %s467
        %s469 = sand.u32 %s116, 1
        %s470 = smul.addr %s469, 8
        %s471 = scalar_lea.vmem [#allocation11], %s470
        %p472 = pneg %p129
        %p473 = pneg %p126
        %p474 = pneg %p150
        %p475 = pneg %p147
        %p476 = pneg %p171
        %p477 = pneg %p168
        %p478 = pneg %p192
        %p479 = pneg %p189
        %p480 = pneg %p213
        %p481 = pneg %p210
        %p482 = pneg %p234
        %p483 = pneg %p231
        %p484 = pneg %p255
        %p485 = pneg %p252
        %p486 = pneg %p283
        %p487 = pneg %p280
        %s488 = sand.u32 %s270, 1
        %s489 = scalar_lea.sflag [#allocation8], %s488
        %s490 = sand.u32 %s270, 1
        %s491 = smul.addr %s490, 8
        %s492 = scalar_lea.vmem [#allocation17], %s491
        %p493 = scmp.eq.s32.totalorder %s38, 0
        // Predicated region
        $region81: #{tpu_custom_call.1} parent=55 // pred_check
          %p494 = pneg %p493
        $region82: #{tpu_custom_call.1} parent=55 // pred_check_branch
          %496 = sbr.rel (%p494) target = $region84
        $region83: #{tpu_custom_call.1} parent=55 // pred_region
          %v497 = vld [vmem:[%s418] sm:$0xff]
          %v498 = vld [vmem:[#allocation12] sm:$0xff]
          %v499 = vld [vmem:[#allocation12 + $0x8] sm:$0xff]
          %v500 = vld [vmem:[#allocation12 + $0x10] sm:$0xff]
          %v501 = vld [vmem:[#allocation12 + $0x18] sm:$0xff]
          %v502 = vld [vmem:[%s4] sm:$0x1]
          %v504 = vlaneseq
          %v505 = vshrl.u32 %v504, 7
          %v506 = vsub.s32 0, %v505
          %v507 = vrot.slane %v502, %v506
          %vm509 = vcmask 261120
          %v511 = vsel %vm509, %v497, 0
          %513 = vmatprep.subr.mxu0 0.0
          %514 = vmatpush1.msra.mxu0 %v498
          %515 = vmatprep.subr.mxu0 0.0
          %516 = vmatpush1.msra.mxu0 %v499
          %517 = vmatprep.subr.mxu0 0.0
          %518 = vmatpush1.msra.mxu0 %v500
          %519 = vmatprep.subr.mxu0 0.0
          %520 = vmatpush1.msra.mxu0 %v501
          %521 = vmatprep.subr.mxu0 0.0
          %522 = vmatpush1.msra.mxu0 0.0
          %523 = vmatprep.subr.mxu0 0.0
          %524 = vmatpush1.msra.mxu0 0.0
          %525 = vmatprep.subr.mxu0 0.0
          %526 = vmatpush1.msra.mxu0 0.0
          %527 = vmatprep.subr.mxu0 0.0
          %528 = vmatpush1.msra.mxu0 0.0
          %529 = vmatprep.subr.mxu0 0.0
          %530 = vmatpush1.msra.mxu0 0.0
          %531 = vmatprep.subr.mxu0 0.0
          %532 = vmatpush1.msra.mxu0 0.0
          %533 = vmatprep.subr.mxu0 0.0
          %534 = vmatpush1.msra.mxu0 0.0
          %535 = vmatprep.subr.mxu0 0.0
          %536 = vmatpush1.msra.mxu0 0.0
          %537 = vmatprep.subr.mxu0 0.0
          %538 = vmatpush1.msra.mxu0 0.0
          %539 = vmatprep.subr.mxu0 0.0
          %540 = vmatpush1.msra.mxu0 0.0
          %541 = vmatprep.subr.mxu0 0.0
          %542 = vmatpush1.msra.mxu0 0.0
          %543 = vmatprep.subr.mxu0 0.0
          %544 = vmatpush1.msra.mxu0 0.0
          %545 = vmatprep.subr.mxu0 0.0
          %546 = vmatpush1.msra.mxu0 0.0
          %547 = vmatprep.subr.mxu0 0.0
          %548 = vmatpush1.msra.mxu0 0.0
          %549 = vmatprep.subr.mxu0 0.0
          %550 = vmatpush1.msra.mxu0 0.0
          %551 = vmatprep.subr.mxu0 0.0
          %552 = vmatpush1.msra.mxu0 0.0
          %553 = vmatprep.subr.mxu0 0.0
          %554 = vmatpush1.msra.mxu0 0.0
          %555 = vmatprep.subr.mxu0 0.0
          %556 = vmatpush1.msra.mxu0 0.0
          %557 = vmatprep.subr.mxu0 0.0
          %558 = vmatpush1.msra.mxu0 0.0
          %559 = vmatprep.subr.mxu0 0.0
          %560 = vmatpush1.msra.mxu0 0.0
          %561 = vmatprep.subr.mxu0 0.0
          %562 = vmatpush1.msra.mxu0 0.0
          %563 = vmatprep.subr.mxu0 0.0
          %564 = vmatpush1.msra.mxu0 0.0
          %565 = vmatprep.subr.mxu0 0.0
          %566 = vmatpush1.msra.mxu0 0.0
          %567 = vmatprep.subr.mxu0 0.0
          %568 = vmatpush1.msra.mxu0 0.0
          %569 = vmatprep.subr.mxu0 0.0
          %570 = vmatpush1.msra.mxu0 0.0
          %571 = vmatprep.subr.mxu0 0.0
          %572 = vmatpush1.msra.mxu0 0.0
          %573 = vmatprep.subr.mxu0 0.0
          %574 = vmatpush1.msra.mxu0 0.0
          %575 = vmatprep.subr.mxu0 0.0
          %576 = vmatpush1.msra.mxu0 0.0
          %577 = vmatprep.mubr.f32.mxu0 0.0
          %578 = vmatmul.mubr.f32.gmra.mrb[0].mxu0 %v511
          %v579 = vpop.f32.mrb[0].mxu0
          %v580 = vadd.f32 %v507, %v579
          %v581 = vpop.f32.mrb[0].mxu0
          %582 = vdwg.mxu0
          %583 = vst [vmem:[#allocation2] sm:$0xff] %v580
          %vm584 = vcmask 7168
          %585 = vst.msk [vmem:[#allocation3] sm:$0xff] %vm584, -inf
          %586 = vst.msk [vmem:[#allocation4] sm:$0xff] %vm584, 0.0
          %587 = vst [vmem:[#allocation5] sm:$0xff] 0.0
        $region84: #{tpu_custom_call.1} parent=55 // pred_fallthru
          _
        %v588 = vld [vmem:[%s427] sm:$0xff]
        %v589 = vld [vmem:[#allocation14] sm:$0xff]
        %v590 = vld [vmem:[#allocation14 + $0x8] sm:$0xff]
        %v591 = vld [vmem:[#allocation14 + $0x10] sm:$0xff]
        %v592 = vld [vmem:[#allocation14 + $0x18] sm:$0xff]
        %v593 = vld [vmem:[%s6] sm:$0x1]
        %v595 = vlaneseq
        %v596 = vshrl.u32 %v595, 7
        %v597 = vsub.s32 0, %v596
        %v598 = vrot.slane %v593, %v597
        %vm600 = vcmask 261120
        %v602 = vsel %vm600, %v588, 0
        %604 = vmatprep.subr.mxu0 0.0
        %605 = vmatpush1.msra.mxu0 %v589
        %606 = vmatprep.subr.mxu0 0.0
        %607 = vmatpush1.msra.mxu0 %v590
        %608 = vmatprep.subr.mxu0 0.0
        %609 = vmatpush1.msra.mxu0 %v591
        %610 = vmatprep.subr.mxu0 0.0
        %611 = vmatpush1.msra.mxu0 %v592
        %612 = vmatprep.subr.mxu0 0.0
        %613 = vmatpush1.msra.mxu0 0.0
        %614 = vmatprep.subr.mxu0 0.0
        %615 = vmatpush1.msra.mxu0 0.0
        %616 = vmatprep.subr.mxu0 0.0
        %617 = vmatpush1.msra.mxu0 0.0
        %618 = vmatprep.subr.mxu0 0.0
        %619 = vmatpush1.msra.mxu0 0.0
        %620 = vmatprep.subr.mxu0 0.0
        %621 = vmatpush1.msra.mxu0 0.0
        %622 = vmatprep.subr.mxu0 0.0
        %623 = vmatpush1.msra.mxu0 0.0
        %624 = vmatprep.subr.mxu0 0.0
        %625 = vmatpush1.msra.mxu0 0.0
        %626 = vmatprep.subr.mxu0 0.0
        %627 = vmatpush1.msra.mxu0 0.0
        %628 = vmatprep.subr.mxu0 0.0
        %629 = vmatpush1.msra.mxu0 0.0
        %630 = vmatprep.subr.mxu0 0.0
        %631 = vmatpush1.msra.mxu0 0.0
        %632 = vmatprep.subr.mxu0 0.0
        %633 = vmatpush1.msra.mxu0 0.0
        %634 = vmatprep.subr.mxu0 0.0
        %635 = vmatpush1.msra.mxu0 0.0
        %636 = vmatprep.subr.mxu0 0.0
        %637 = vmatpush1.msra.mxu0 0.0
        %638 = vmatprep.subr.mxu0 0.0
        %639 = vmatpush1.msra.mxu0 0.0
        %640 = vmatprep.subr.mxu0 0.0
        %641 = vmatpush1.msra.mxu0 0.0
        %642 = vmatprep.subr.mxu0 0.0
        %643 = vmatpush1.msra.mxu0 0.0
        %644 = vmatprep.subr.mxu0 0.0
        %645 = vmatpush1.msra.mxu0 0.0
        %646 = vmatprep.subr.mxu0 0.0
        %647 = vmatpush1.msra.mxu0 0.0
        %648 = vmatprep.subr.mxu0 0.0
        %649 = vmatpush1.msra.mxu0 0.0
        %650 = vmatprep.subr.mxu0 0.0
        %651 = vmatpush1.msra.mxu0 0.0
        %652 = vmatprep.subr.mxu0 0.0
        %653 = vmatpush1.msra.mxu0 0.0
        %654 = vmatprep.subr.mxu0 0.0
        %655 = vmatpush1.msra.mxu0 0.0
        %656 = vmatprep.subr.mxu0 0.0
        %657 = vmatpush1.msra.mxu0 0.0
        %658 = vmatprep.subr.mxu0 0.0
        %659 = vmatpush1.msra.mxu0 0.0
        %660 = vmatprep.subr.mxu0 0.0
        %661 = vmatpush1.msra.mxu0 0.0
        %662 = vmatprep.subr.mxu0 0.0
        %663 = vmatpush1.msra.mxu0 0.0
        %664 = vmatprep.subr.mxu0 0.0
        %665 = vmatpush1.msra.mxu0 0.0
        %666 = vmatprep.subr.mxu0 0.0
        %667 = vmatpush1.msra.mxu0 0.0
        %668 = vmatprep.mubr.f32.mxu0 0.0
        %669 = vmatmul.mubr.f32.gmra.mrb[0].mxu0 %v602
        %v670 = vpop.f32.mrb[0].mxu0
        %v671 = vadd.f32 %v598, %v670
        %v672 = vpop.f32.mrb[0].mxu0
        %673 = vdwg.mxu0
        %v674 = vld [vmem:[%s436] sm:$0xff]
        %v675 = vld [vmem:[#allocation15] sm:$0xff]
        %v676 = vld [vmem:[#allocation15 + $0x8] sm:$0xff]
        %v677 = vld [vmem:[#allocation15 + $0x10] sm:$0xff]
        %v678 = vld [vmem:[#allocation15 + $0x18] sm:$0xff]
        %v679 = vld [vmem:[%s8] sm:$0x1]
        %v681 = vlaneseq
        %v682 = vshrl.u32 %v681, 7
        %v683 = vsub.s32 0, %v682
        %v684 = vrot.slane %v679, %v683
        %v687 = vsel %vm600, %v674, 0
        %689 = vmatprep.subr.mxu0 0.0
        %690 = vmatpush1.msra.mxu0 %v675
        %691 = vmatprep.subr.mxu0 0.0
        %692 = vmatpush1.msra.mxu0 %v676
        %693 = vmatprep.subr.mxu0 0.0
        %694 = vmatpush1.msra.mxu0 %v677
        %695 = vmatprep.subr.mxu0 0.0
        %696 = vmatpush1.msra.mxu0 %v678
        %697 = vmatprep.subr.mxu0 0.0
        %698 = vmatpush1.msra.mxu0 0.0
        %699 = vmatprep.subr.mxu0 0.0
        %700 = vmatpush1.msra.mxu0 0.0
        %701 = vmatprep.subr.mxu0 0.0
        %702 = vmatpush1.msra.mxu0 0.0
        %703 = vmatprep.subr.mxu0 0.0
        %704 = vmatpush1.msra.mxu0 0.0
        %705 = vmatprep.subr.mxu0 0.0
        %706 = vmatpush1.msra.mxu0 0.0
        %707 = vmatprep.subr.mxu0 0.0
        %708 = vmatpush1.msra.mxu0 0.0
        %709 = vmatprep.subr.mxu0 0.0
        %710 = vmatpush1.msra.mxu0 0.0
        %711 = vmatprep.subr.mxu0 0.0
        %712 = vmatpush1.msra.mxu0 0.0
        %713 = vmatprep.subr.mxu0 0.0
        %714 = vmatpush1.msra.mxu0 0.0
        %715 = vmatprep.subr.mxu0 0.0
        %716 = vmatpush1.msra.mxu0 0.0
        %717 = vmatprep.subr.mxu0 0.0
        %718 = vmatpush1.msra.mxu0 0.0
        %719 = vmatprep.subr.mxu0 0.0
        %720 = vmatpush1.msra.mxu0 0.0
        %721 = vmatprep.subr.mxu0 0.0
        %722 = vmatpush1.msra.mxu0 0.0
        %723 = vmatprep.subr.mxu0 0.0
        %724 = vmatpush1.msra.mxu0 0.0
        %725 = vmatprep.subr.mxu0 0.0
        %726 = vmatpush1.msra.mxu0 0.0
        %727 = vmatprep.subr.mxu0 0.0
        %728 = vmatpush1.msra.mxu0 0.0
        %729 = vmatprep.subr.mxu0 0.0
        %730 = vmatpush1.msra.mxu0 0.0
        %731 = vmatprep.subr.mxu0 0.0
        %732 = vmatpush1.msra.mxu0 0.0
        %733 = vmatprep.subr.mxu0 0.0
        %734 = vmatpush1.msra.mxu0 0.0
        %735 = vmatprep.subr.mxu0 0.0
        %736 = vmatpush1.msra.mxu0 0.0
        %737 = vmatprep.subr.mxu0 0.0
        %738 = vmatpush1.msra.mxu0 0.0
        %739 = vmatprep.subr.mxu0 0.0
        %740 = vmatpush1.msra.mxu0 0.0
        %741 = vmatprep.subr.mxu0 0.0
        %742 = vmatpush1.msra.mxu0 0.0
        %743 = vmatprep.subr.mxu0 0.0
        %744 = vmatpush1.msra.mxu0 0.0
        %745 = vmatprep.subr.mxu0 0.0
        %746 = vmatpush1.msra.mxu0 0.0
        %747 = vmatprep.subr.mxu0 0.0
        %748 = vmatpush1.msra.mxu0 0.0
        %749 = vmatprep.subr.mxu0 0.0
        %750 = vmatpush1.msra.mxu0 0.0
        %751 = vmatprep.subr.mxu0 0.0
        %752 = vmatpush1.msra.mxu0 0.0
        %753 = vmatprep.mubr.f32.mxu0 0.0
        %754 = vmatmul.mubr.f32.gmra.mrb[0].mxu0 %v687
        %v755 = vpop.f32.mrb[0].mxu0
        %v756 = vadd.f32 %v684, %v755
        %v757 = vpop.f32.mrb[0].mxu0
        %758 = vdwg.mxu0
        %v759 = vld [vmem:[#allocation2] sm:$0xff]
        %760 = vmatprep.subr.mxu0 0.0
        %761 = vmatpush1.xpose.msra.mxu0 %v671
        %762 = vmatprep.subr.mxu0 0.0
        %763 = vmatpush1.xpose.msra.mxu0 0.0
        %764 = vmatprep.subr.mxu0 0.0
        %765 = vmatpush1.xpose.msra.mxu0 0.0
        %766 = vmatprep.subr.mxu0 0.0
        %767 = vmatpush1.xpose.msra.mxu0 0.0
        %768 = vmatprep.subr.mxu0 0.0
        %769 = vmatpush1.xpose.msra.mxu0 0.0
        %770 = vmatprep.subr.mxu0 0.0
        %771 = vmatpush1.xpose.msra.mxu0 0.0
        %772 = vmatprep.subr.mxu0 0.0
        %773 = vmatpush1.xpose.msra.mxu0 0.0
        %774 = vmatprep.subr.mxu0 0.0
        %775 = vmatpush1.xpose.msra.mxu0 0.0
        %776 = vmatprep.subr.mxu0 0.0
        %777 = vmatpush1.xpose.msra.mxu0 0.0
        %778 = vmatprep.subr.mxu0 0.0
        %779 = vmatpush1.xpose.msra.mxu0 0.0
        %780 = vmatprep.subr.mxu0 0.0
        %781 = vmatpush1.xpose.msra.mxu0 0.0
        %782 = vmatprep.subr.mxu0 0.0
        %783 = vmatpush1.xpose.msra.mxu0 0.0
        %784 = vmatprep.subr.mxu0 0.0
        %785 = vmatpush1.xpose.msra.mxu0 0.0
        %786 = vmatprep.subr.mxu0 0.0
        %787 = vmatpush1.xpose.msra.mxu0 0.0
        %788 = vmatprep.subr.mxu0 0.0
        %789 = vmatpush1.xpose.msra.mxu0 0.0
        %790 = vmatprep.subr.mxu0 0.0
        %791 = vmatpush1.xpose.msra.mxu0 0.0
        %792 = vmatprep.subr.mxu0 0.0
        %793 = vmatpush1.xpose.msra.mxu0 0.0
        %794 = vmatprep.subr.mxu0 0.0
        %795 = vmatpush1.xpose.msra.mxu0 0.0
        %796 = vmatprep.subr.mxu0 0.0
        %797 = vmatpush1.xpose.msra.mxu0 0.0
        %798 = vmatprep.subr.mxu0 0.0
        %799 = vmatpush1.xpose.msra.mxu0 0.0
        %800 = vmatprep.subr.mxu0 0.0
        %801 = vmatpush1.xpose.msra.mxu0 0.0
        %802 = vmatprep.subr.mxu0 0.0
        %803 = vmatpush1.xpose.msra.mxu0 0.0
        %804 = vmatprep.subr.mxu0 0.0
        %805 = vmatpush1.xpose.msra.mxu0 0.0
        %806 = vmatprep.subr.mxu0 0.0
        %807 = vmatpush1.xpose.msra.mxu0 0.0
        %808 = vmatprep.subr.mxu0 0.0
        %809 = vmatpush1.xpose.msra.mxu0 0.0
        %810 = vmatprep.subr.mxu0 0.0
        %811 = vmatpush1.xpose.msra.mxu0 0.0
        %812 = vmatprep.subr.mxu0 0.0
        %813 = vmatpush1.xpose.msra.mxu0 0.0
        %814 = vmatprep.subr.mxu0 0.0
        %815 = vmatpush1.xpose.msra.mxu0 0.0
        %816 = vmatprep.subr.mxu0 0.0
        %817 = vmatpush1.xpose.msra.mxu0 0.0
        %818 = vmatprep.subr.mxu0 0.0
        %819 = vmatpush1.xpose.msra.mxu0 0.0
        %820 = vmatprep.subr.mxu0 0.0
        %821 = vmatpush1.xpose.msra.mxu0 0.0
        %822 = vmatprep.subr.mxu0 0.0
        %823 = vmatpush1.xpose.msra.mxu0 0.0
        %824 = vmatprep.mubr.f32.mxu0 0.0
        %825 = vmatmul.mubr.f32.gmra.mrb[0].mxu0 %v759
        %v826 = vpop.f32.mrb[0].mxu0
        %v827 = vadd.f32 0.0, %v826
        %v828 = vpop.f32.mrb[0].mxu0
        %829 = vdwg.mxu0
        %v830 = vld [vmem:[#allocation3] sm:$0xff]
        %vm831 = vcmask 64512
        %v832 = vsel %vm831, %v827, -inf
        %833 = vmax.xlane.f32.xlu0 %v832
        %v834 = vpop.xlane.xlu0 %833
        %v835 = vmax.f32 %v830, %v834
        %v836 = vsub.f32 %v830, %v835
        %v837 = vmul.f32 %v836, 1.442695
        %v838 = vpow.pop %v837
        %840 = vset.pattern.permute.xlu0 0
        %841 = vperm.xlu0 %840, %v835
        %v842 = vpop.permute.xlu0 %841
        %v844 = vsub.f32 %v827, %v842
        %v845 = vmul.f32 %v844, 1.442695
        %v846 = vpow.pop %v845
        %v847 = vld [vmem:[#allocation4] sm:$0xff]
        %v848 = vmul.f32 %v838, %v847
        %v849 = vsel %vm831, %v846, 0.0
        %850 = vadd.xlane.f32.xlu0 %v849
        %v851 = vpop.xlane.xlu0 %850
        %v852 = vadd.f32 %v848, %v851
        %vm853 = vcmask 7168
        %854 = vst.msk [vmem:[#allocation4] sm:$0xff] %vm853, %v852
        %v855 = vld [vmem:[#allocation5] sm:$0xff]
        %857 = vset.pattern.permute.xlu0 0
        %858 = vperm.xlu0 %857, %v838
        %v859 = vpop.permute.xlu0 %858
        %v861 = vmul.f32 %v859, %v855
        %v863 = vsel %vm831, %v846, 0
        %865 = vmatprep.subr.mxu0 0.0
        %866 = vmatpush1.msra.mxu0 %v756
        %867 = vmatprep.subr.mxu0 0.0
        %868 = vmatpush1.msra.mxu0 0.0
        %869 = vmatprep.subr.mxu0 0.0
        %870 = vmatpush1.msra.mxu0 0.0
        %871 = vmatprep.subr.mxu0 0.0
        %872 = vmatpush1.msra.mxu0 0.0
        %873 = vmatprep.subr.mxu0 0.0
        %874 = vmatpush1.msra.mxu0 0.0
        %875 = vmatprep.subr.mxu0 0.0
        %876 = vmatpush1.msra.mxu0 0.0
        %877 = vmatprep.subr.mxu0 0.0
        %878 = vmatpush1.msra.mxu0 0.0
        %879 = vmatprep.subr.mxu0 0.0
        %880 = vmatpush1.msra.mxu0 0.0
        %881 = vmatprep.subr.mxu0 0.0
        %882 = vmatpush1.msra.mxu0 0.0
        %883 = vmatprep.subr.mxu0 0.0
        %884 = vmatpush1.msra.mxu0 0.0
        %885 = vmatprep.subr.mxu0 0.0
        %886 = vmatpush1.msra.mxu0 0.0
        %887 = vmatprep.subr.mxu0 0.0
        %888 = vmatpush1.msra.mxu0 0.0
        %889 = vmatprep.subr.mxu0 0.0
        %890 = vmatpush1.msra.mxu0 0.0
        %891 = vmatprep.subr.mxu0 0.0
        %892 = vmatpush1.msra.mxu0 0.0
        %893 = vmatprep.subr.mxu0 0.0
        %894 = vmatpush1.msra.mxu0 0.0
        %895 = vmatprep.subr.mxu0 0.0
        %896 = vmatpush1.msra.mxu0 0.0
        %897 = vmatprep.subr.mxu0 0.0
        %898 = vmatpush1.msra.mxu0 0.0
        %899 = vmatprep.subr.mxu0 0.0
        %900 = vmatpush1.msra.mxu0 0.0
        %901 = vmatprep.subr.mxu0 0.0
        %902 = vmatpush1.msra.mxu0 0.0
        %903 = vmatprep.subr.mxu0 0.0
        %904 = vmatpush1.msra.mxu0 0.0
        %905 = vmatprep.subr.mxu0 0.0
        %906 = vmatpush1.msra.mxu0 0.0
        %907 = vmatprep.subr.mxu0 0.0
        %908 = vmatpush1.msra.mxu0 0.0
        %909 = vmatprep.subr.mxu0 0.0
        %910 = vmatpush1.msra.mxu0 0.0
        %911 = vmatprep.subr.mxu0 0.0
        %912 = vmatpush1.msra.mxu0 0.0
        %913 = vmatprep.subr.mxu0 0.0
        %914 = vmatpush1.msra.mxu0 0.0
        %915 = vmatprep.subr.mxu0 0.0
        %916 = vmatpush1.msra.mxu0 0.0
        %917 = vmatprep.subr.mxu0 0.0
        %918 = vmatpush1.msra.mxu0 0.0
        %919 = vmatprep.subr.mxu0 0.0
        %920 = vmatpush1.msra.mxu0 0.0
        %921 = vmatprep.subr.mxu0 0.0
        %922 = vmatpush1.msra.mxu0 0.0
        %923 = vmatprep.subr.mxu0 0.0
        %924 = vmatpush1.msra.mxu0 0.0
        %925 = vmatprep.subr.mxu0 0.0
        %926 = vmatpush1.msra.mxu0 0.0
        %927 = vmatprep.subr.mxu0 0.0
        %928 = vmatpush1.msra.mxu0 0.0
        %929 = vmatprep.mubr.f32.mxu0 0.0
        %930 = vmatmul.mubr.f32.gmra.mrb[0].mxu0 %v863
        %v931 = vpop.f32.mrb[0].mxu0
        %v932 = vadd.f32 0.0, %v931
        %v933 = vpop.f32.mrb[0].mxu0
        %934 = vdwg.mxu0
        %v935 = vadd.f32 %v861, %v932
        %936 = vst [vmem:[#allocation5] sm:$0xff] %v935
        %937 = vst.msk [vmem:[#allocation3] sm:$0xff] %vm853, %v835
        // Predicated region
        $region85: #{tpu_custom_call.1} parent=55 // pred_check
          %p938 = pneg %p493
        $region86: #{tpu_custom_call.1} parent=55 // pred_check_branch
          %940 = sbr.rel (%p938) target = $region88
        $region87: #{tpu_custom_call.1} parent=55 // pred_region
          %v941 = vld [vmem:[#allocation4] sm:$0xff]
          %v942 = vrcp.pop %v941
          %v943 = vld [vmem:[#allocation5] sm:$0xff]
          %945 = vset.pattern.permute.xlu0 0
          %946 = vperm.xlu0 %945, %v942
          %v947 = vpop.permute.xlu0 %946
          %v949 = vmul.f32 %v943, %v947
          %950 = vst [vmem:[%s492] sm:$0xff] %v949
        $region88: #{tpu_custom_call.1} parent=55 // pred_fallthru
          _
        %s951 = sand.u32 %s270, 1
        %s952 = scalar_lea.sflag [#allocation8], %s951
        %s953 = sand.u32 %s270, 1
        %s954 = smul.addr %s953, 8
        %s955 = scalar_lea.vmem [#allocation17], %s954
        // Predicated region
        $region89: #{tpu_custom_call.1} parent=55 // pred_check
          %p956 = pneg %p280
        $region90: #{tpu_custom_call.1} parent=55 // pred_check_branch
          %958 = sbr.rel (%p956) target = $region92
        $region91: #{tpu_custom_call.1} parent=55 // pred_region
          %s960 = ssub.s32 128, 128
          %961 = vsyncadd %s952, %s960
          %s962 = sadd.s32 %s37, %s36
          %s963 = smul.addr %s962, 128
          %s964 = scalar_lea.hbm %s9, %s963
          %s966 = sshll.u32 %s955, 4
          %s967 = int_to_ptr.vmem [resolvable:$true] %s966
          %969 = dma.vmem_to_hbm [thread:$0]  %s967, 128, %s964, %s952
        $region92: #{tpu_custom_call.1} parent=55 // pred_fallthru
          _
      $region56: #{tpu_custom_call.1} parent=5 // pred_fallthru
        _
      %p970 = scmp.le.s32.totalorder 2, %s26
      // Predicated region
      $region93: #{tpu_custom_call.1} parent=5 // pred_check
        %p971 = pneg %p970
      $region94: #{tpu_custom_call.1} parent=5 // pred_check_branch
        %973 = sbr.rel (%p971) target = $region96
      $region95: #{tpu_custom_call.1} parent=5 // pred_region
        %s974 = ssub.s32 %s26, 2
        // Predicated region
        $region97: #{tpu_custom_call.1} parent=95 // pred_check
          %p975 = pneg %p286
        $region98: #{tpu_custom_call.1} parent=95 // pred_check_branch
          %977 = sbr.rel (%p975) target = $region100
        $region99: #{tpu_custom_call.1} parent=95 // pred_region
          %s978 = sand.u32 %s271, 1
          %s979 = scalar_lea.sflag [#allocation8], %s978
          %s980 = sand.u32 %s271, 1
          %s981 = smul.addr %s980, 8
          %s982 = scalar_lea.vmem [#allocation17], %s981
          %983 = dma.done %s979, 128
        $region100: #{tpu_custom_call.1} parent=95 // pred_fallthru
          _
      $region96: #{tpu_custom_call.1} parent=5 // pred_fallthru
        _
    $region6: #{tpu_custom_call.1} parent=1 // loop_footer
      %s30 = sadd.s32 1, %s26
    $region7: #{tpu_custom_call.1} parent=1 // loop_footer_branch
      %25 = sbr.rel target = $region3
    $region8: #{tpu_custom_call.1} parent=1 // loop_exit
      _
    %984 = vsyncpa [#allocation7], 1
    %s985 = scalar_lea.sflag [#allocation7], 1
    %986 = vsyncpa %s985, 1
    %987 = vsyncpa [#allocation10], 1
    %s988 = scalar_lea.sflag [#allocation10], 1
    %989 = vsyncpa %s988, 1
    %990 = vsyncpa [#allocation13], 1
    %991 = vsyncpa [#allocation16], 1
    %992 = vsyncpa [#allocation8], 1
    %s993 = scalar_lea.sflag [#allocation8], 1
    %994 = vsyncpa %s993, 1

</llo_original>
